<compile_context>
chip_gen: v5e
topology: v5e:2x2
jax: 0.10.0
libtpu: 0.0.40
codegen_flags: <defaults>
</compile_context>

<pallas_src>
import numpy as np
import jax
import jax.numpy as jnp
from jax.experimental import pallas as pl
from jax.experimental.pallas import tpu as pltpu


def _round_up(v, m):
    return ((v + m - 1) // m) * m


def _scale_rows(scale_row, mat):
    """Return mat[s, :] * scale_row[0, s] via a diag matmul.

    Avoids the (1, S) -> (S, 1) sublane/lane relayout: builds diag(scale) with
    broadcasted_iota + where (sublane broadcast only) and feeds the MXU a
    canonical (S, S) @ (S, D) matmul.
    """
    s_p = mat.shape[0]
    r = jax.lax.broadcasted_iota(jnp.int32, (s_p, s_p), 0)
    c = jax.lax.broadcasted_iota(jnp.int32, (s_p, s_p), 1)
    diag = jnp.where(r == c, jnp.broadcast_to(scale_row, (s_p, s_p)), 0.0)
    return jax.lax.dot_general(diag, mat, (((1,), (0,)), ((), ())),
                               preferred_element_type=jnp.float32)


def attention_pooling_kernel(x_ref, pe_ref, segc_ref, segr_ref, wx_ref, scal_ref,
                             out_ref, m_ref, l_ref, acc_ref):
    step = pl.program_id(0)
    tb = x_ref.shape[0]
    s_p, _ = acc_ref.shape
    neg_inf = jnp.float32(-jnp.inf)

    @pl.when(step == 0)
    def _init():
        m_ref[...] = jnp.full_like(m_ref, -jnp.inf)
        l_ref[...] = jnp.zeros_like(l_ref)
        acc_ref[...] = jnp.zeros_like(acc_ref)

    x = x_ref[...]                                   # (TB, D_p) f32
    w_x = wx_ref[...]                                # (1, D_p)  f32
    w_pe = scal_ref[0]                               # scalar (SMEM)
    bias = scal_ref[1]                               # scalar (SMEM)

    # Linear head: logits[r] = x[r, :].w_x + pe[r]*w_pe + bias   -> (TB, 1)
    logits = (jnp.sum(x * w_x, axis=1, keepdims=True)
              + pe_ref[...] * w_pe + bias)

    # Rebuild one-hot membership masks in-kernel from int32 segment ids.
    seg_col = segc_ref[...]                          # (TB, 1) int32, -1 for pad rows
    seg_row = segr_ref[...]                          # (1, TB) int32
    lane_seg = jax.lax.broadcasted_iota(jnp.int32, (tb, s_p), 1)
    sub_seg = jax.lax.broadcasted_iota(jnp.int32, (s_p, tb), 0)
    mask_col = seg_col == lane_seg                   # (TB, S_p) bool
    mask_col_f = mask_col.astype(jnp.float32)
    mask_row_f = (sub_seg == seg_row).astype(jnp.float32)   # (S_p, TB), pre-transposed

    # --- online (per-segment) softmax statistics over this row tile ---
    masked = jnp.where(mask_col, logits, neg_inf)    # (TB, S_p)
    tile_max = jnp.max(masked, axis=0, keepdims=True)        # (1, S_p)

    m_old = m_ref[...]
    m_new = jnp.maximum(m_old, tile_max)
    # Guard against -inf for segments with no rows seen yet (no 0 * -inf NaNs).
    m_safe = jnp.where(jnp.isfinite(m_new), m_new, 0.0)      # (1, S_p) finite
    alpha = jnp.exp(m_old - m_safe)                           # (1, S_p); 0 if m_old=-inf

    # Per-row gather of its segment's running max, then stable exp.
    row_m = jnp.sum(mask_col_f * m_safe, axis=1, keepdims=True)   # (TB, 1)
    p = jnp.exp(logits - row_m)                                    # (TB, 1)

    seg_sum = jnp.sum(mask_col_f * p, axis=0, keepdims=True)       # (1, S_p)
    l_ref[...] = alpha * l_ref[...] + seg_sum
    m_ref[...] = m_new

    # Pooling contribution: canonical (S_p, TB) @ (TB, D_p) MXU matmul.
    contrib = jax.lax.dot_general(mask_row_f, p * x,
                                  (((1,), (0,)), ((), ())),
                                  preferred_element_type=jnp.float32)
    acc_ref[...] = _scale_rows(alpha, acc_ref[...]) + contrib

    @pl.when(step == pl.num_programs(0) - 1)
    def _finalize():
        l = l_ref[...]
        recip = 1.0 / jnp.where(l > 0.0, l, 1.0)      # safe for empty/pad segments
        out_ref[...] = _scale_rows(recip, acc_ref[...]).astype(out_ref.dtype)


def attention_pooling(x, slices, weight, bias, *, block_b=512):
    """x: (B, D) float32; slices: python list of ints summing to B.

    weight: (1, D+1) linear weight (col 0 = positional-encoding weight);
    bias: (1,) linear bias.  Single head.  Returns (len(slices), D) float32.
    """
    b, d = x.shape
    s = len(slices)
    assert sum(slices) == b
    assert block_b % 128 == 0

    d_p = _round_up(max(d, 1), 128)          # lane-dense features / output
    s_p = _round_up(max(s, 1), 8)            # sublane-aligned segment rows
    tb = min(block_b, _round_up(b, 128))     # row tile (multiple of 128)
    b_p = _round_up(b, tb)
    n_steps = b_p // tb

    # --- wrapper glue: padding, positional encoding, segment ids, weights ---
    x_p = jnp.zeros((b_p, d_p), jnp.float32).at[:b, :d].set(x.astype(jnp.float32))
    pe = jnp.concatenate([jnp.arange(n, dtype=jnp.float32) / n for n in slices])
    pe_p = jnp.zeros((b_p, 1), jnp.float32).at[:b, 0].set(pe)

    seg_ids = np.full((b_p,), -1, dtype=np.int32)        # -1 => padding row
    seg_ids[:b] = np.repeat(np.arange(s, dtype=np.int32), slices)
    seg_col = jnp.asarray(seg_ids.reshape(b_p, 1))
    seg_row = jnp.asarray(seg_ids.reshape(1, b_p))

    w = jnp.asarray(weight, jnp.float32).reshape(-1)     # (D+1,)
    w_x = jnp.zeros((1, d_p), jnp.float32).at[0, :d].set(w[1:])
    scal = jnp.stack([w[0], jnp.asarray(bias, jnp.float32).reshape(())])  # (2,) SMEM

    grid_spec = pltpu.PrefetchScalarGridSpec(
        num_scalar_prefetch=0,
        grid=(n_steps,),
        in_specs=[
            pl.BlockSpec((tb, d_p), lambda i: (i, 0)),   # x tile
            pl.BlockSpec((tb, 1), lambda i: (i, 0)),     # positional encoding
            pl.BlockSpec((tb, 1), lambda i: (i, 0)),     # segment ids (column form)
            pl.BlockSpec((1, tb), lambda i: (0, i)),     # segment ids (row form)
            pl.BlockSpec((1, d_p), lambda i: (0, 0)),    # x-part of linear weight
            pl.BlockSpec(memory_space=pltpu.MemorySpace.SMEM),  # [w_pe, bias] scalars
        ],
        out_specs=pl.BlockSpec((s_p, d_p), lambda i: (0, 0)),
        scratch_shapes=[
            pltpu.VMEM((1, s_p), jnp.float32),           # running per-segment max
            pltpu.VMEM((1, s_p), jnp.float32),           # running per-segment denom
            pltpu.VMEM((s_p, d_p), jnp.float32),         # running weighted sum
        ],
    )

    out = pl.pallas_call(
        attention_pooling_kernel,
        out_shape=jax.ShapeDtypeStruct((s_p, d_p), jnp.float32),
        grid_spec=grid_spec,
        compiler_params=pltpu.CompilerParams(
            dimension_semantics=("arbitrary",),          # online reduction over B tiles
            vmem_limit_bytes=32 * 1024 * 1024,
        ),
    )(x_p, pe_p, seg_col, seg_row, w_x, scal)

    return out[:s, :d]


def reference_numpy(x, slices, weight, bias):
    x = np.asarray(x, np.float32)
    pe = np.concatenate([np.arange(n, dtype=np.float32) / n for n in slices])
    phi = np.concatenate([pe[:, None], x], axis=1)
    logits = phi @ np.asarray(weight, np.float32).reshape(-1, 1) \
        + np.asarray(bias, np.float32).reshape(1, 1)
    attn = np.zeros_like(logits)
    off = 0
    for n in slices:
        seg = logits[off:off + n]
        e = np.exp(seg - seg.max(axis=0, keepdims=True))
        attn[off:off + n] = e / e.sum(axis=0, keepdims=True)
        off += n
    ctx = attn * x
    pooled = []
    off = 0
    for n in slices:
        pooled.append(ctx[off:off + n].sum(axis=0))
        off += n
    return np.stack(pooled)


if __name__ == "__main__":
    # Module config: hidden_dimension=8, num_heads=1 (default head count).
    hidden_dimension = 8
    slices = [100, 150, 7]        # B=257: exercises B-tiling, pad rows, empty-in-tile segments
    b = sum(slices)

    key = jax.random.PRNGKey(0)
    kx, kw, kb = jax.random.split(key, 3)
    x = jax.random.normal(kx, (b, hidden_dimension), dtype=jnp.float32)
    # nn.Linear(hidden_dimension + 1, 1): weight (1, D+1), bias (1,)
    weight = jax.random.normal(kw, (1, hidden_dimension + 1), dtype=jnp.float32) * 0.1
    bias = jax.random.normal(kb, (1,), dtype=jnp.float32) * 0.1

    # block_b=128 -> 3 grid steps, so the online-softmax / tiling path is exercised.
    pooled = attention_pooling(x, slices, weight, bias, block_b=128)
    pooled = jax.block_until_ready(pooled)

    ref = reference_numpy(np.asarray(x), slices, np.asarray(weight), np.asarray(bias))
    np.testing.assert_allclose(np.asarray(pooled), ref, rtol=1e-5, atol=1e-5)
    print("KERNEL_OK")
</pallas_src>

<mosaic_0001>
module attributes {stable_mosaic.version = 11 : i64} {
  func.func @attention_pooling_kernel(%arg0: i32, %arg1: memref<128x128xf32, #tpu.memory_space<vmem>>, %arg2: memref<128x1xf32, #tpu.memory_space<vmem>>, %arg3: memref<128x1xi32, #tpu.memory_space<vmem>>, %arg4: memref<1x128xi32, #tpu.memory_space<vmem>>, %arg5: memref<1x128xf32, #tpu.memory_space<vmem>>, %arg6: memref<2xf32, #tpu.memory_space<smem>>, %arg7: memref<8x128xf32, #tpu.memory_space<vmem>>, %arg8: memref<1x8xf32, #tpu.memory_space<vmem>>, %arg9: memref<1x8xf32, #tpu.memory_space<vmem>>, %arg10: memref<8x128xf32, #tpu.memory_space<vmem>>) attributes {dimension_semantics = [#tpu.dimension_semantics<arbitrary>], iteration_bounds = array<i64: 3>, scalar_prefetch = 0 : i64, scratch_operands = 3 : i64, tpu.core_type = #tpu.core_type<tc>, window_params = [{transform_indices = @transform_0, window_bounds = array<i64: 128, 128>}, {transform_indices = @transform_1, window_bounds = array<i64: 128, 1>}, {transform_indices = @transform_2, window_bounds = array<i64: 128, 1>}, {transform_indices = @transform_3, window_bounds = array<i64: 1, 128>}, {pipeline_mode = #tpu.pipeline_mode<synchronous>, transform_indices = @transform_4, window_bounds = array<i64: 1, 128>}, {transform_indices = @transform_5, window_bounds = array<i64: 2>}, {pipeline_mode = #tpu.pipeline_mode<synchronous>, transform_indices = @transform_6, window_bounds = array<i64: 8, 128>}]} {
    %c0_i32 = arith.constant 0 : i32
    %0 = arith.cmpi eq, %arg0, %c0_i32 : i32
    %1 = arith.extui %0 : i1 to i32
    %c0_i32_0 = arith.constant 0 : i32
    %2 = arith.cmpi ne, %1, %c0_i32_0 : i32
    scf.if %2 {
      %cst_33 = arith.constant 0xFF800000 : f32
      %75 = vector.broadcast %cst_33 : f32 to vector<1x8xf32>
      %c0_34 = arith.constant 0 : index
      %c0_35 = arith.constant 0 : index
      %76 = vector.load %arg8[%c0_34, %c0_35] : memref<1x8xf32, #tpu.memory_space<vmem>>, vector<1x8xf32>
      tpu.vector_store %arg8[%c0_34, %c0_35], %75 {strides = array<i32>} : memref<1x8xf32, #tpu.memory_space<vmem>>, vector<1x8xf32>,
      %cst_36 = arith.constant 0.000000e+00 : f32
      %77 = vector.broadcast %cst_36 : f32 to vector<1x8xf32>
      %c0_37 = arith.constant 0 : index
      %c0_38 = arith.constant 0 : index
      %78 = vector.load %arg9[%c0_37, %c0_38] : memref<1x8xf32, #tpu.memory_space<vmem>>, vector<1x8xf32>
      tpu.vector_store %arg9[%c0_37, %c0_38], %77 {strides = array<i32>} : memref<1x8xf32, #tpu.memory_space<vmem>>, vector<1x8xf32>,
      %cst_39 = arith.constant 0.000000e+00 : f32
      %79 = vector.broadcast %cst_39 : f32 to vector<8x128xf32>
      %c0_40 = arith.constant 0 : index
      %c0_41 = arith.constant 0 : index
      %80 = vector.load %arg10[%c0_40, %c0_41] : memref<8x128xf32, #tpu.memory_space<vmem>>, vector<8x128xf32>
      tpu.vector_store %arg10[%c0_40, %c0_41], %79 {strides = array<i32>} : memref<8x128xf32, #tpu.memory_space<vmem>>, vector<8x128xf32>,
    } else {
    }
    %c0 = arith.constant 0 : index
    %c0_1 = arith.constant 0 : index
    %3 = vector.load %arg1[%c0, %c0_1] : memref<128x128xf32, #tpu.memory_space<vmem>>, vector<128x128xf32>
    %c0_2 = arith.constant 0 : index
    %c0_3 = arith.constant 0 : index
    %4 = vector.load %arg5[%c0_2, %c0_3] : memref<1x128xf32, #tpu.memory_space<vmem>>, vector<1x128xf32>
    %c0_4 = arith.constant 0 : index
    %5 = memref.load %arg6[%c0_4] : memref<2xf32, #tpu.memory_space<smem>>
    %c1 = arith.constant 1 : index
    %6 = memref.load %arg6[%c1] : memref<2xf32, #tpu.memory_space<smem>>
    %7 = vector.broadcast %4 : vector<1x128xf32> to vector<128x128xf32>
    %8 = arith.mulf %3, %7 : vector<128x128xf32>
    %cst = arith.constant dense<0.000000e+00> : vector<128xf32>
    %9 = vector.multi_reduction <add>, %8, %cst [1] : vector<128x128xf32> to vector<128xf32>
    %10 = vector.shape_cast %9 : vector<128xf32> to vector<128x1xf32>
    %c0_5 = arith.constant 0 : index
    %c0_6 = arith.constant 0 : index
    %11 = vector.load %arg2[%c0_5, %c0_6] : memref<128x1xf32, #tpu.memory_space<vmem>>, vector<128x1xf32>
    %12 = vector.broadcast %5 : f32 to vector<128x1xf32>
    %13 = arith.mulf %11, %12 : vector<128x1xf32>
    %14 = arith.addf %10, %13 : vector<128x1xf32>
    %15 = vector.broadcast %6 : f32 to vector<128x1xf32>
    %16 = arith.addf %14, %15 : vector<128x1xf32>
    %c0_7 = arith.constant 0 : index
    %c0_8 = arith.constant 0 : index
    %17 = vector.load %arg3[%c0_7, %c0_8] : memref<128x1xi32, #tpu.memory_space<vmem>>, vector<128x1xi32>
    %c0_9 = arith.constant 0 : index
    %c0_10 = arith.constant 0 : index
    %18 = vector.load %arg4[%c0_9, %c0_10] : memref<1x128xi32, #tpu.memory_space<vmem>>, vector<1x128xi32>
    %19 = tpu.iota {dimensions = array<i32: 1>} : vector<128x8xi32>
    %20 = tpu.iota {dimensions = array<i32: 0>} : vector<8x128xi32>
    %21 = vector.broadcast %17 : vector<128x1xi32> to vector<128x8xi32>
    %22 = arith.cmpi eq, %21, %19 : vector<128x8xi32>
    %23 = arith.extui %22 : vector<128x8xi1> to vector<128x8xi32>
    %24 = arith.sitofp %23 : vector<128x8xi32> to vector<128x8xf32>
    %25 = vector.broadcast %18 : vector<1x128xi32> to vector<8x128xi32>
    %26 = arith.cmpi eq, %20, %25 : vector<8x128xi32>
    %27 = arith.extui %26 : vector<8x128xi1> to vector<8x128xi32>
    %28 = arith.sitofp %27 : vector<8x128xi32> to vector<8x128xf32>
    %cst_11 = arith.constant 0xFF800000 : f32
    %29 = vector.shape_cast %16 : vector<128x1xf32> to vector<128x1xf32>
    %30 = vector.broadcast %29 : vector<128x1xf32> to vector<128x8xf32>
    %31 = vector.broadcast %cst_11 : f32 to vector<128x8xf32>
    %32 = arith.select %22, %30, %31 : vector<128x8xi1>, vector<128x8xf32>
    %cst_12 = arith.constant dense<0xFF800000> : vector<8xf32>
    %33 = vector.multi_reduction <maximumf>, %32, %cst_12 [0] : vector<128x8xf32> to vector<8xf32>
    %34 = vector.shape_cast %33 : vector<8xf32> to vector<1x8xf32>
    %c0_13 = arith.constant 0 : index
    %c0_14 = arith.constant 0 : index
    %35 = vector.load %arg8[%c0_13, %c0_14] : memref<1x8xf32, #tpu.memory_space<vmem>>, vector<1x8xf32>
    %36 = arith.maximumf %35, %34 : vector<1x8xf32>
    %37 = tpu.weird %36 : vector<1x8xf32> -> vector<1x8xi1>
    %cst_15 = arith.constant dense<true> : vector<1x8xi1>
    %38 = arith.xori %37, %cst_15 : vector<1x8xi1>
    %cst_16 = arith.constant 0.000000e+00 : f32
    %39 = vector.broadcast %cst_16 : f32 to vector<1x8xf32>
    %40 = arith.select %38, %36, %39 : vector<1x8xi1>, vector<1x8xf32>
    %41 = arith.subf %35, %40 : vector<1x8xf32>
    %42 = math.exp %41 : vector<1x8xf32>
    %43 = vector.broadcast %40 : vector<1x8xf32> to vector<128x8xf32>
    %44 = arith.mulf %24, %43 : vector<128x8xf32>
    %cst_17 = arith.constant dense<0.000000e+00> : vector<128xf32>
    %45 = vector.multi_reduction <add>, %44, %cst_17 [1] : vector<128x8xf32> to vector<128xf32>
    %46 = vector.shape_cast %45 : vector<128xf32> to vector<128x1xf32>
    %47 = arith.subf %16, %46 : vector<128x1xf32>
    %48 = math.exp %47 : vector<128x1xf32>
    %49 = vector.broadcast %48 : vector<128x1xf32> to vector<128x8xf32>
    %50 = arith.mulf %24, %49 : vector<128x8xf32>
    %cst_18 = arith.constant dense<0.000000e+00> : vector<8xf32>
    %51 = vector.multi_reduction <add>, %50, %cst_18 [0] : vector<128x8xf32> to vector<8xf32>
    %52 = vector.shape_cast %51 : vector<8xf32> to vector<1x8xf32>
    %c0_19 = arith.constant 0 : index
    %c0_20 = arith.constant 0 : index
    %53 = vector.load %arg9[%c0_19, %c0_20] : memref<1x8xf32, #tpu.memory_space<vmem>>, vector<1x8xf32>
    %54 = arith.mulf %42, %53 : vector<1x8xf32>
    %55 = arith.addf %54, %52 : vector<1x8xf32>
    %c0_21 = arith.constant 0 : index
    %c0_22 = arith.constant 0 : index
    %56 = vector.load %arg9[%c0_21, %c0_22] : memref<1x8xf32, #tpu.memory_space<vmem>>, vector<1x8xf32>
    tpu.vector_store %arg9[%c0_21, %c0_22], %55 {strides = array<i32>} : memref<1x8xf32, #tpu.memory_space<vmem>>, vector<1x8xf32>,
    %c0_23 = arith.constant 0 : index
    %c0_24 = arith.constant 0 : index
    %57 = vector.load %arg8[%c0_23, %c0_24] : memref<1x8xf32, #tpu.memory_space<vmem>>, vector<1x8xf32>
    tpu.vector_store %arg8[%c0_23, %c0_24], %36 {strides = array<i32>} : memref<1x8xf32, #tpu.memory_space<vmem>>, vector<1x8xf32>,
    %58 = vector.broadcast %48 : vector<128x1xf32> to vector<128x128xf32>
    %59 = arith.mulf %58, %3 : vector<128x128xf32>
    %cst_25 = arith.constant dense<0.000000e+00> : vector<8x128xf32>
    %60 = tpu.matmul %28, %59, %cst_25 {dimension_numbers = #tpu.dot_dimension_numbers<[1], [0], [0], [1], [0, 0, 1, 1], [], []>} : vector<8x128xf32>, vector<128x128xf32>, vector<8x128xf32> -> vector<8x128xf32>
    %c0_26 = arith.constant 0 : index
    %c0_27 = arith.constant 0 : index
    %61 = vector.load %arg10[%c0_26, %c0_27] : memref<8x128xf32, #tpu.memory_space<vmem>>, vector<8x128xf32>
    %62 = tpu.iota {dimensions = array<i32: 0>} : vector<8x8xi32>
    %63 = tpu.iota {dimensions = array<i32: 1>} : vector<8x8xi32>
    %64 = arith.cmpi eq, %62, %63 : vector<8x8xi32>
    %65 = vector.shape_cast %42 : vector<1x8xf32> to vector<1x8xf32>
    %66 = vector.broadcast %65 : vector<1x8xf32> to vector<8x8xf32>
    %cst_28 = arith.constant 0.000000e+00 : f32
    %67 = vector.broadcast %cst_28 : f32 to vector<8x8xf32>
    %68 = arith.select %64, %66, %67 : vector<8x8xi1>, vector<8x8xf32>
    %cst_29 = arith.constant dense<0.000000e+00> : vector<8x128xf32>
    %69 = tpu.matmul %68, %61, %cst_29 {dimension_numbers = #tpu.dot_dimension_numbers<[1], [0], [0], [1], [0, 0, 1, 1], [], []>} : vector<8x8xf32>, vector<8x128xf32>, vector<8x128xf32> -> vector<8x128xf32>
    %70 = arith.addf %69, %60 : vector<8x128xf32>
    %c0_30 = arith.constant 0 : index
    %c0_31 = arith.constant 0 : index
    %71 = vector.load %arg10[%c0_30, %c0_31] : memref<8x128xf32, #tpu.memory_space<vmem>>, vector<8x128xf32>
    tpu.vector_store %arg10[%c0_30, %c0_31], %70 {strides = array<i32>} : memref<8x128xf32, #tpu.memory_space<vmem>>, vector<8x128xf32>,
    %c2_i32 = arith.constant 2 : i32
    %72 = arith.cmpi eq, %arg0, %c2_i32 : i32
    %73 = arith.extui %72 : i1 to i32
    %c0_i32_32 = arith.constant 0 : i32
    %74 = arith.cmpi ne, %73, %c0_i32_32 : i32
    scf.if %74 {
      %c0_33 = arith.constant 0 : index
      %c0_34 = arith.constant 0 : index
      %75 = vector.load %arg9[%c0_33, %c0_34] : memref<1x8xf32, #tpu.memory_space<vmem>>, vector<1x8xf32>
      %cst_35 = arith.constant 0.000000e+00 : f32
      %76 = vector.broadcast %cst_35 : f32 to vector<1x8xf32>
      %77 = arith.cmpf ogt, %75, %76 : vector<1x8xf32>
      %cst_36 = arith.constant 1.000000e+00 : f32
      %78 = vector.broadcast %cst_36 : f32 to vector<1x8xf32>
      %79 = arith.select %77, %75, %78 : vector<1x8xi1>, vector<1x8xf32>
      %cst_37 = arith.constant 1.000000e+00 : f32
      %80 = vector.broadcast %cst_37 : f32 to vector<1x8xf32>
      %81 = arith.divf %80, %79 : vector<1x8xf32>
      %c0_38 = arith.constant 0 : index
      %c0_39 = arith.constant 0 : index
      %82 = vector.load %arg10[%c0_38, %c0_39] : memref<8x128xf32, #tpu.memory_space<vmem>>, vector<8x128xf32>
      %83 = tpu.iota {dimensions = array<i32: 0>} : vector<8x8xi32>
      %84 = tpu.iota {dimensions = array<i32: 1>} : vector<8x8xi32>
      %85 = arith.cmpi eq, %83, %84 : vector<8x8xi32>
      %86 = vector.shape_cast %81 : vector<1x8xf32> to vector<1x8xf32>
      %87 = vector.broadcast %86 : vector<1x8xf32> to vector<8x8xf32>
      %cst_40 = arith.constant 0.000000e+00 : f32
      %88 = vector.broadcast %cst_40 : f32 to vector<8x8xf32>
      %89 = arith.select %85, %87, %88 : vector<8x8xi1>, vector<8x8xf32>
      %cst_41 = arith.constant dense<0.000000e+00> : vector<8x128xf32>
      %90 = tpu.matmul %89, %82, %cst_41 {dimension_numbers = #tpu.dot_dimension_numbers<[1], [0], [0], [1], [0, 0, 1, 1], [], []>} : vector<8x8xf32>, vector<8x128xf32>, vector<8x128xf32> -> vector<8x128xf32>
      %c0_42 = arith.constant 0 : index
      %c0_43 = arith.constant 0 : index
      %91 = vector.load %arg7[%c0_42, %c0_43] : memref<8x128xf32, #tpu.memory_space<vmem>>, vector<8x128xf32>
      tpu.vector_store %arg7[%c0_42, %c0_43], %90 {strides = array<i32>} : memref<8x128xf32, #tpu.memory_space<vmem>>, vector<8x128xf32>,
    } else {
    }
    return
  }
  func.func @transform_0(%arg0: i32) -> (i32, i32) {
    %c0_i32 = arith.constant 0 : i32
    %c0_i32_0 = arith.constant 0 : i32
    return %arg0, %c0_i32 : i32, i32
  }
  func.func @transform_1(%arg0: i32) -> (i32, i32) {
    %c0_i32 = arith.constant 0 : i32
    %c0_i32_0 = arith.constant 0 : i32
    return %arg0, %c0_i32 : i32, i32
  }
  func.func @transform_2(%arg0: i32) -> (i32, i32) {
    %c0_i32 = arith.constant 0 : i32
    %c0_i32_0 = arith.constant 0 : i32
    return %arg0, %c0_i32 : i32, i32
  }
  func.func @transform_3(%arg0: i32) -> (i32, i32) {
    %c0_i32 = arith.constant 0 : i32
    %c0_i32_0 = arith.constant 0 : i32
    return %c0_i32, %arg0 : i32, i32
  }
  func.func @transform_4(%arg0: i32) -> (i32, i32) {
    %c0_i32 = arith.constant 0 : i32
    %c0_i32_0 = arith.constant 0 : i32
    %c0_i32_1 = arith.constant 0 : i32
    return %c0_i32, %c0_i32_0 : i32, i32
  }
  func.func @transform_5(%arg0: i32) -> i32 {
    %c0_i32 = arith.constant 0 : i32
    %c0_i32_0 = arith.constant 0 : i32
    return %c0_i32 : i32
  }
  func.func @transform_6(%arg0: i32) -> (i32, i32) {
    %c0_i32 = arith.constant 0 : i32
    %c0_i32_0 = arith.constant 0 : i32
    %c0_i32_1 = arith.constant 0 : i32
    return %c0_i32, %c0_i32_0 : i32, i32
  }
}

</mosaic_0001>

<llo_original>
// kernel: tpu_custom_call.1
$region0: #{tpu_custom_call.1}
  #allocation0 [shape = 'u32[]', space=smem, size = 0x4, offset = 0x4, fixed_abs, tag = 'smem constant byte address 0x4 - core index']
  #allocation1 [shape = 'u32[72,128]{1,0:T(1,128)}', space=vmem, size = 0x9000, scoped, tag = 'internal scratch']
  #allocation2 [shape = 'f32[1,8]{1,0:T(1,128)}', space=vmem, size = 0x200, scoped, tag = 'scratch operand']
  #allocation3 [shape = 'f32[1,8]{1,0:T(1,128)}', space=vmem, size = 0x200, scoped, tag = 'scratch operand']
  #allocation4 [shape = 'f32[8,128]{1,0:T(8,128)}', space=vmem, size = 0x1000, scoped, tag = 'scratch operand']
  %s0 = inlined_call_operand.vmem [shape: f32[384,128], index: 0, kind: input, shape index: {}]
  %s1 = inlined_call_operand.vmem [shape: f32[384,1], index: 1, kind: input, shape index: {}]
  %s2 = inlined_call_operand.vmem [shape: s32[384,1], index: 2, kind: input, shape index: {}]
  %s3 = inlined_call_operand.vmem [shape: s32[1,384], index: 3, kind: input, shape index: {}]
  %s4 = inlined_call_operand.vmem [shape: f32[1,128], index: 4, kind: input, shape index: {}]
  %s5 = inlined_call_operand.vmem [shape: f32[2], index: 5, kind: input, shape index: {}]
  %s6 = inlined_call_operand.hbm [shape: f32[8,128], index: 6, kind: output, shape index: {}]
  %s7 = sld [smem:[#allocation0]]
  $region69: #{tpu_custom_call.1} parent=0
    _
  %s9 = ssub.s32 1, %s7
  %s10 = scalar_select 0, %s9, %s7
  $region1: #{tpu_custom_call.1} parent=0
    #allocation5 [shape = 'u8[512]{0}', space=smem, size = 0x200, scoped, tag = 'input window, operand 5, single buffered']
    #allocation6 [shape = 's32[2]{0}', space=sflag, size = 0x8, scoped, tag = 'scoped memory for tpu_custom_call.1']
    #allocation7 [shape = 's32[2]{0}', space=sflag, size = 0x8, scoped, tag = 'scoped memory for tpu_custom_call.1']
    #allocation8 [shape = 'u8[4096]{0}', space=vmem, size = 0x1000, scoped, tag = 'output window, operand 0, single buffered']
    %11 = vsyncpa [#allocation7], 0
    %12 = vsyncpa [#allocation6], 0
    loop: start=0, step=1, limit=5
    $region2: #{tpu_custom_call.1} parent=1 // loop_pre_header
      _
    $region3: #{tpu_custom_call.1} parent=1 // loop_header
      %s14 = sphi 0, %s18
      %p15 = scmp.ge.s32.totalorder %s14, 5
      %s24 = sphi 0, %s26
      %s27 = sphi 0, %s24
      %s28 = sphi 0, %s27
      %s44 = sphi 0, %s28
      %s50 = sphi 0, %s52
      %s53 = sphi 0, %s50
      %s54 = sphi 0, %s53
      %s70 = sphi 0, %s54
      %s76 = sphi 0, %s78
      %s79 = sphi 0, %s76
      %s80 = sphi 0, %s79
      %s96 = sphi 0, %s80
      %s102 = sphi 0, %s104
      %s105 = sphi 0, %s102
      %s106 = sphi 0, %s105
      %s122 = sphi 0, %s106
      %s126 = sphi 0, %s126
      %s128 = sphi 0, %s126
      %s129 = sphi 0, %s128
      %s143 = sphi 0, %s129
      %s147 = sphi 0, %s147
      %s149 = sphi 0, %s147
      %s150 = sphi 0, %s149
      %s164 = sphi 0, %s150
      %s168 = sphi 0, %s168
      %s170 = sphi 0, %s168
      %s171 = sphi 0, %s170
      %s185 = sphi 0, %s171
    $region4: #{tpu_custom_call.1} parent=1 // loop_header_branch
      %17 = sbr.rel (%p15) target = $region8
    $region5: #{tpu_custom_call.1} parent=1 // loop_body
      %s19 = ssub.s32 %s14, 1
      %s20 = ssub.s32 %s14, 2
      %s21 = sadd.s32 %s14, 1
      %s22 = ssub.s32 %s14, %s21
      %p23 = scmp.eq.s32.totalorder %s22, 0
      %s25 = sadd.s32 %s24, 1
      %s26 = scalar_select %p23, %s24, %s25
      %p29 = pneg %p23
      %p30 = scmp.eq.s32.totalorder %s14, 2
      %p31 = por %p29, %p30
      %p32 = scmp.ne.s32.totalorder %s24, %s27
      %p33 = scmp.eq.s32.totalorder %s14, 0
      %p34 = por %p32, %p33
      %p35 = scmp.ne.s32.totalorder %s24, %s27
      %p36 = scmp.eq.s32.totalorder %s19, 2
      %p37 = por %p35, %p36
      %p38 = scmp.ne.s32.totalorder %s27, %s28
      %p39 = scmp.eq.s32.totalorder %s19, 0
      %p40 = por %p38, %p39
      %p41 = scmp.ne.s32.totalorder %s27, %s28
      %p42 = scmp.eq.s32.totalorder %s20, 2
      %p43 = por %p41, %p42
      %p45 = scmp.ne.s32.totalorder %s28, %s44
      %p46 = scmp.eq.s32.totalorder %s20, 0
      %p47 = por %p45, %p46
      %s48 = ssub.s32 %s14, %s21
      %p49 = scmp.eq.s32.totalorder %s48, 0
      %s51 = sadd.s32 %s50, 1
      %s52 = scalar_select %p49, %s50, %s51
      %p55 = pneg %p49
      %p56 = scmp.eq.s32.totalorder %s14, 2
      %p57 = por %p55, %p56
      %p58 = scmp.ne.s32.totalorder %s50, %s53
      %p59 = scmp.eq.s32.totalorder %s14, 0
      %p60 = por %p58, %p59
      %p61 = scmp.ne.s32.totalorder %s50, %s53
      %p62 = scmp.eq.s32.totalorder %s19, 2
      %p63 = por %p61, %p62
      %p64 = scmp.ne.s32.totalorder %s53, %s54
      %p65 = scmp.eq.s32.totalorder %s19, 0
      %p66 = por %p64, %p65
      %p67 = scmp.ne.s32.totalorder %s53, %s54
      %p68 = scmp.eq.s32.totalorder %s20, 2
      %p69 = por %p67, %p68
      %p71 = scmp.ne.s32.totalorder %s54, %s70
      %p72 = scmp.eq.s32.totalorder %s20, 0
      %p73 = por %p71, %p72
      %s74 = ssub.s32 %s14, %s21
      %p75 = scmp.eq.s32.totalorder %s74, 0
      %s77 = sadd.s32 %s76, 1
      %s78 = scalar_select %p75, %s76, %s77
      %p81 = pneg %p75
      %p82 = scmp.eq.s32.totalorder %s14, 2
      %p83 = por %p81, %p82
      %p84 = scmp.ne.s32.totalorder %s76, %s79
      %p85 = scmp.eq.s32.totalorder %s14, 0
      %p86 = por %p84, %p85
      %p87 = scmp.ne.s32.totalorder %s76, %s79
      %p88 = scmp.eq.s32.totalorder %s19, 2
      %p89 = por %p87, %p88
      %p90 = scmp.ne.s32.totalorder %s79, %s80
      %p91 = scmp.eq.s32.totalorder %s19, 0
      %p92 = por %p90, %p91
      %p93 = scmp.ne.s32.totalorder %s79, %s80
      %p94 = scmp.eq.s32.totalorder %s20, 2
      %p95 = por %p93, %p94
      %p97 = scmp.ne.s32.totalorder %s80, %s96
      %p98 = scmp.eq.s32.totalorder %s20, 0
      %p99 = por %p97, %p98
      %s100 = ssub.s32 %s14, %s21
      %p101 = scmp.eq.s32.totalorder %s100, 0
      %s103 = sadd.s32 %s102, 1
      %s104 = scalar_select %p101, %s102, %s103
      %p107 = pneg %p101
      %p108 = scmp.eq.s32.totalorder %s14, 2
      %p109 = por %p107, %p108
      %p110 = scmp.ne.s32.totalorder %s102, %s105
      %p111 = scmp.eq.s32.totalorder %s14, 0
      %p112 = por %p110, %p111
      %p113 = scmp.ne.s32.totalorder %s102, %s105
      %p114 = scmp.eq.s32.totalorder %s19, 2
      %p115 = por %p113, %p114
      %p116 = scmp.ne.s32.totalorder %s105, %s106
      %p117 = scmp.eq.s32.totalorder %s19, 0
      %p118 = por %p116, %p117
      %p119 = scmp.ne.s32.totalorder %s105, %s106
      %p120 = scmp.eq.s32.totalorder %s20, 2
      %p121 = por %p119, %p120
      %p123 = scmp.ne.s32.totalorder %s106, %s122
      %p124 = scmp.eq.s32.totalorder %s20, 0
      %p125 = por %p123, %p124
      %s127 = sadd.s32 %s126, 1
      %p130 = scmp.eq.s32.totalorder %s14, 2
      %p131 = scmp.ne.s32.totalorder %s126, %s128
      %p132 = scmp.eq.s32.totalorder %s14, 0
      %p133 = por %p131, %p132
      %p134 = scmp.ne.s32.totalorder %s126, %s128
      %p135 = scmp.eq.s32.totalorder %s19, 2
      %p136 = por %p134, %p135
      %p137 = scmp.ne.s32.totalorder %s128, %s129
      %p138 = scmp.eq.s32.totalorder %s19, 0
      %p139 = por %p137, %p138
      %p140 = scmp.ne.s32.totalorder %s128, %s129
      %p141 = scmp.eq.s32.totalorder %s20, 2
      %p142 = por %p140, %p141
      %p144 = scmp.ne.s32.totalorder %s129, %s143
      %p145 = scmp.eq.s32.totalorder %s20, 0
      %p146 = por %p144, %p145
      %s148 = sadd.s32 %s147, 1
      %p151 = scmp.eq.s32.totalorder %s14, 2
      %p152 = scmp.ne.s32.totalorder %s147, %s149
      %p153 = scmp.eq.s32.totalorder %s14, 0
      %p154 = por %p152, %p153
      %p155 = scmp.ne.s32.totalorder %s147, %s149
      %p156 = scmp.eq.s32.totalorder %s19, 2
      %p157 = por %p155, %p156
      %p158 = scmp.ne.s32.totalorder %s149, %s150
      %p159 = scmp.eq.s32.totalorder %s19, 0
      %p160 = por %p158, %p159
      %p161 = scmp.ne.s32.totalorder %s149, %s150
      %p162 = scmp.eq.s32.totalorder %s20, 2
      %p163 = por %p161, %p162
      %p165 = scmp.ne.s32.totalorder %s150, %s164
      %p166 = scmp.eq.s32.totalorder %s20, 0
      %p167 = por %p165, %p166
      %s169 = sadd.s32 %s168, 1
      %p172 = scmp.eq.s32.totalorder %s14, 2
      %p173 = scmp.ne.s32.totalorder %s168, %s170
      %p174 = scmp.eq.s32.totalorder %s14, 0
      %p175 = por %p173, %p174
      %p176 = scmp.ne.s32.totalorder %s168, %s170
      %p177 = scmp.eq.s32.totalorder %s19, 2
      %p178 = por %p176, %p177
      %p179 = scmp.ne.s32.totalorder %s170, %s171
      %p180 = scmp.eq.s32.totalorder %s19, 0
      %p181 = por %p179, %p180
      %p182 = scmp.ne.s32.totalorder %s170, %s171
      %p183 = scmp.eq.s32.totalorder %s20, 2
      %p184 = por %p182, %p183
      %p186 = scmp.ne.s32.totalorder %s171, %s185
      %p187 = scmp.eq.s32.totalorder %s20, 0
      %p188 = por %p186, %p187
      %p189 = scmp.le.s32.totalorder 1, %s14
      %p190 = scmp.lt.s32.totalorder %s14, 4
      %p191 = pnand %p189, %p190
      %p192 = pneg %p191
      // Predicated region
      $region9: #{tpu_custom_call.1} parent=5 // pred_check
        _
      $region10: #{tpu_custom_call.1} parent=5 // pred_check_branch
        %194 = sbr.rel (%p191) target = $region12
      $region11: #{tpu_custom_call.1} parent=5 // pred_region
        %s195 = ssub.s32 %s14, 1
        // Predicated region
        $region13: #{tpu_custom_call.1} parent=11 // pred_check
          %p196 = pneg %p139
        $region14: #{tpu_custom_call.1} parent=11 // pred_check_branch
          %198 = sbr.rel (%p196) target = $region16
        $region15: #{tpu_custom_call.1} parent=11 // pred_region
          _
        $region16: #{tpu_custom_call.1} parent=11 // pred_fallthru
          _
        // Predicated region
        $region17: #{tpu_custom_call.1} parent=11 // pred_check
          %p199 = pneg %p160
        $region18: #{tpu_custom_call.1} parent=11 // pred_check_branch
          %201 = sbr.rel (%p199) target = $region20
        $region19: #{tpu_custom_call.1} parent=11 // pred_region
          %203 = vsyncadd [#allocation7], 0
          %s205 = sshll.u32 %s5, 4
          %s206 = int_to_ptr.vmem [resolvable:$true] %s205
          %208 = dma.vmem_to_smem %s206, 16, [#allocation5], [#allocation7]
        $region20: #{tpu_custom_call.1} parent=11 // pred_fallthru
          _
      $region12: #{tpu_custom_call.1} parent=5 // pred_fallthru
        _
      %p209 = scmp.lt.s32.totalorder %s14, 3
      // Predicated region
      $region21: #{tpu_custom_call.1} parent=5 // pred_check
        %p210 = pneg %p209
      $region22: #{tpu_custom_call.1} parent=5 // pred_check_branch
        %212 = sbr.rel (%p210) target = $region24
      $region23: #{tpu_custom_call.1} parent=5 // pred_region
        // Predicated region
        $region25: #{tpu_custom_call.1} parent=23 // pred_check
          %p213 = pneg %p34
        $region26: #{tpu_custom_call.1} parent=23 // pred_check_branch
          %215 = sbr.rel (%p213) target = $region28
        $region27: #{tpu_custom_call.1} parent=23 // pred_region
          %s216 = smul.u32 16, %s14
          %p217 = scmp.lt.s32.totalorder %s216, 47
          %s218 = scalar_select %p217, %s216, 47
          %s219 = smul.addr %s218, 8
          %s220 = scalar_lea.vmem %s0, %s219
          %s221 = smul.u32 16, %s14
        $region28: #{tpu_custom_call.1} parent=23 // pred_fallthru
          _
        // Predicated region
        $region29: #{tpu_custom_call.1} parent=23 // pred_check
          %p222 = pneg %p60
        $region30: #{tpu_custom_call.1} parent=23 // pred_check_branch
          %224 = sbr.rel (%p222) target = $region32
        $region31: #{tpu_custom_call.1} parent=23 // pred_region
          %s225 = smul.u32 16, %s14
          %p226 = scmp.lt.s32.totalorder %s225, 47
          %s227 = scalar_select %p226, %s225, 47
          %s228 = smul.addr %s227, 8
          %s229 = scalar_lea.vmem %s1, %s228
          %s230 = smul.u32 16, %s14
        $region32: #{tpu_custom_call.1} parent=23 // pred_fallthru
          _
        // Predicated region
        $region33: #{tpu_custom_call.1} parent=23 // pred_check
          %p231 = pneg %p86
        $region34: #{tpu_custom_call.1} parent=23 // pred_check_branch
          %233 = sbr.rel (%p231) target = $region36
        $region35: #{tpu_custom_call.1} parent=23 // pred_region
          %s234 = smul.u32 16, %s14
          %p235 = scmp.lt.s32.totalorder %s234, 47
          %s236 = scalar_select %p235, %s234, 47
          %s237 = smul.addr %s236, 8
          %s238 = scalar_lea.vmem %s2, %s237
          %s239 = smul.u32 16, %s14
        $region36: #{tpu_custom_call.1} parent=23 // pred_fallthru
          _
        // Predicated region
        $region37: #{tpu_custom_call.1} parent=23 // pred_check
          %p240 = pneg %p112
        $region38: #{tpu_custom_call.1} parent=23 // pred_check_branch
          %242 = sbr.rel (%p240) target = $region40
        $region39: #{tpu_custom_call.1} parent=23 // pred_region
          %p243 = scmp.lt.s32.totalorder %s14, 2
          %s244 = scalar_select %p243, %s14, 2
          %s245 = scalar_lea.vmem %s3, %s244
        $region40: #{tpu_custom_call.1} parent=23 // pred_fallthru
          _
      $region24: #{tpu_custom_call.1} parent=5 // pred_fallthru
        _
      %p246 = scmp.le.s32.totalorder 1, %s14
      %p247 = scmp.lt.s32.totalorder %s14, 4
      %p248 = pnand %p246, %p247
      %p249 = pneg %p248
      // Predicated region
      $region41: #{tpu_custom_call.1} parent=5 // pred_check
        _
      $region42: #{tpu_custom_call.1} parent=5 // pred_check_branch
        %251 = sbr.rel (%p248) target = $region44
      $region43: #{tpu_custom_call.1} parent=5 // pred_region
        %s252 = ssub.s32 %s14, 1
        // Predicated region
        $region45: #{tpu_custom_call.1} parent=43 // pred_check
          %p253 = pneg %p160
        $region46: #{tpu_custom_call.1} parent=43 // pred_check_branch
          %255 = sbr.rel (%p253) target = $region48
        $region47: #{tpu_custom_call.1} parent=43 // pred_region
          %257 = dma.done [#allocation7], 16
        $region48: #{tpu_custom_call.1} parent=43 // pred_fallthru
          _
        %258 = sfence
        %s259 = smul.u32 16, %s19
        %p260 = scmp.lt.s32.totalorder %s259, 47
        %s261 = scalar_select %p260, %s259, 47
        %s262 = smul.addr %s261, 8
        %s263 = scalar_lea.vmem %s0, %s262
        %p264 = pneg %p40
        %p265 = pneg %p37
        %s266 = smul.u32 16, %s19
        %p267 = scmp.lt.s32.totalorder %s266, 47
        %s268 = scalar_select %p267, %s266, 47
        %s269 = smul.addr %s268, 8
        %s270 = scalar_lea.vmem %s1, %s269
        %p271 = pneg %p66
        %p272 = pneg %p63
        %s273 = smul.u32 16, %s19
        %p274 = scmp.lt.s32.totalorder %s273, 47
        %s275 = scalar_select %p274, %s273, 47
        %s276 = smul.addr %s275, 8
        %s277 = scalar_lea.vmem %s2, %s276
        %p278 = pneg %p92
        %p279 = pneg %p89
        %p280 = scmp.lt.s32.totalorder %s19, 2
        %s281 = scalar_select %p280, %s19, 2
        %s282 = scalar_lea.vmem %s3, %s281
        %p283 = pneg %p118
        %p284 = pneg %p115
        %p285 = pneg %p139
        %p286 = pneg %p136
        %p287 = pneg %p160
        %p288 = pneg %p157
        %p289 = pneg %p181
        %p290 = pneg %p178
        %s291 = smul.u32 16, %s19
        %p292 = scmp.lt.s32.totalorder %s291, 47
        %s293 = scalar_select %p292, %s291, 47
        %s294 = smul.addr %s293, 8
        %s295 = scalar_lea.vmem %s0, %s294
        %s296 = smul.u32 16, %s19
        %s297 = smul.u32 16, %s19
        %p298 = scmp.lt.s32.totalorder %s297, 47
        %s299 = scalar_select %p298, %s297, 47
        %s300 = smul.addr %s299, 8
        %s301 = scalar_lea.vmem %s1, %s300
        %s302 = smul.u32 16, %s19
        %s303 = smul.u32 16, %s19
        %p304 = scmp.lt.s32.totalorder %s303, 47
        %s305 = scalar_select %p304, %s303, 47
        %s306 = smul.addr %s305, 8
        %s307 = scalar_lea.vmem %s2, %s306
        %s308 = smul.u32 16, %s19
        %p309 = scmp.lt.s32.totalorder %s19, 2
        %s310 = scalar_select %p309, %s19, 2
        %s311 = scalar_lea.vmem %s3, %s310
        %p312 = scmp.eq.s32.totalorder %s19, 0
        // Predicated region
        $region49: #{tpu_custom_call.1} parent=43 // pred_check
          %p313 = pneg %p312
        $region50: #{tpu_custom_call.1} parent=43 // pred_check_branch
          %315 = sbr.rel (%p313) target = $region52
        $region51: #{tpu_custom_call.1} parent=43 // pred_region
          %vm316 = vcmask 57344
          %317 = vst.msk [vmem:[#allocation2] sm:$0x1] %vm316, -inf
          %318 = vst.msk [vmem:[#allocation3] sm:$0x1] %vm316, 0.0
          %319 = vst [vmem:[#allocation4] sm:$0xff] 0.0
        $region52: #{tpu_custom_call.1} parent=43 // pred_fallthru
          _
        %v320 = vld [vmem:[%s295] sm:$0xff]
        %v321 = vld [vmem:[%s295 + $0x8] sm:$0xff]
        %v322 = vld [vmem:[%s295 + $0x10] sm:$0xff]
        %v323 = vld [vmem:[%s295 + $0x18] sm:$0xff]
        %v324 = vld [vmem:[%s295 + $0x20] sm:$0xff]
        %v325 = vld [vmem:[%s295 + $0x28] sm:$0xff]
        %v326 = vld [vmem:[%s295 + $0x30] sm:$0xff]
        %v327 = vld [vmem:[%s295 + $0x38] sm:$0xff]
        %v328 = vld [vmem:[%s295 + $0x40] sm:$0xff]
        %v329 = vld [vmem:[%s295 + $0x48] sm:$0xff]
        %v330 = vld [vmem:[%s295 + $0x50] sm:$0xff]
        %v331 = vld [vmem:[%s295 + $0x58] sm:$0xff]
        %v332 = vld [vmem:[%s295 + $0x60] sm:$0xff]
        %v333 = vld [vmem:[%s295 + $0x68] sm:$0xff]
        %v334 = vld [vmem:[%s295 + $0x70] sm:$0xff]
        %v335 = vld [vmem:[%s295 + $0x78] sm:$0xff]
        %v336 = vld [vmem:[%s4] sm:$0x1]
        %s337 = sld [smem:[#allocation5]]
        %s338 = sld [smem:[#allocation5 + $0x1]]
        %v340 = vperm.slane %v336, 0
        %v342 = vmul.f32 %v320, %v340
        %v343 = vmul.f32 %v321, %v340
        %v344 = vmul.f32 %v322, %v340
        %v345 = vmul.f32 %v323, %v340
        %v346 = vmul.f32 %v324, %v340
        %v347 = vmul.f32 %v325, %v340
        %v348 = vmul.f32 %v326, %v340
        %v349 = vmul.f32 %v327, %v340
        %v350 = vmul.f32 %v328, %v340
        %v351 = vmul.f32 %v329, %v340
        %v352 = vmul.f32 %v330, %v340
        %v353 = vmul.f32 %v331, %v340
        %v354 = vmul.f32 %v332, %v340
        %v355 = vmul.f32 %v333, %v340
        %v356 = vmul.f32 %v334, %v340
        %v357 = vmul.f32 %v335, %v340
        %358 = vadd.xlane.f32.xlu0 %v342
        %v359 = vpop.xlane.xlu0 %358
        %360 = vadd.xlane.f32.xlu0 %v343
        %v361 = vpop.xlane.xlu0 %360
        %362 = vadd.xlane.f32.xlu0 %v344
        %v363 = vpop.xlane.xlu0 %362
        %364 = vadd.xlane.f32.xlu0 %v345
        %v365 = vpop.xlane.xlu0 %364
        %366 = vadd.xlane.f32.xlu0 %v346
        %v367 = vpop.xlane.xlu0 %366
        %368 = vadd.xlane.f32.xlu0 %v347
        %v369 = vpop.xlane.xlu0 %368
        %370 = vadd.xlane.f32.xlu0 %v348
        %v371 = vpop.xlane.xlu0 %370
        %372 = vadd.xlane.f32.xlu0 %v349
        %v373 = vpop.xlane.xlu0 %372
        %374 = vadd.xlane.f32.xlu0 %v350
        %v375 = vpop.xlane.xlu0 %374
        %376 = vadd.xlane.f32.xlu0 %v351
        %v377 = vpop.xlane.xlu0 %376
        %378 = vadd.xlane.f32.xlu0 %v352
        %v379 = vpop.xlane.xlu0 %378
        %380 = vadd.xlane.f32.xlu0 %v353
        %v381 = vpop.xlane.xlu0 %380
        %382 = vadd.xlane.f32.xlu0 %v354
        %v383 = vpop.xlane.xlu0 %382
        %384 = vadd.xlane.f32.xlu0 %v355
        %v385 = vpop.xlane.xlu0 %384
        %386 = vadd.xlane.f32.xlu0 %v356
        %v387 = vpop.xlane.xlu0 %386
        %388 = vadd.xlane.f32.xlu0 %v357
        %v389 = vpop.xlane.xlu0 %388
        %v390 = vld [vmem:[%s301] sm:$0xff]
        %v391 = vld [vmem:[%s301 + $0x8] sm:$0xff]
        %v392 = vld [vmem:[%s301 + $0x10] sm:$0xff]
        %v393 = vld [vmem:[%s301 + $0x18] sm:$0xff]
        %v394 = vld [vmem:[%s301 + $0x20] sm:$0xff]
        %v395 = vld [vmem:[%s301 + $0x28] sm:$0xff]
        %v396 = vld [vmem:[%s301 + $0x30] sm:$0xff]
        %v397 = vld [vmem:[%s301 + $0x38] sm:$0xff]
        %v398 = vld [vmem:[%s301 + $0x40] sm:$0xff]
        %v399 = vld [vmem:[%s301 + $0x48] sm:$0xff]
        %v400 = vld [vmem:[%s301 + $0x50] sm:$0xff]
        %v401 = vld [vmem:[%s301 + $0x58] sm:$0xff]
        %v402 = vld [vmem:[%s301 + $0x60] sm:$0xff]
        %v403 = vld [vmem:[%s301 + $0x68] sm:$0xff]
        %v404 = vld [vmem:[%s301 + $0x70] sm:$0xff]
        %v405 = vld [vmem:[%s301 + $0x78] sm:$0xff]
        %v406 = vstv %s337
        %v407 = vmul.f32 %v390, %v406
        %v408 = vmul.f32 %v391, %v406
        %v409 = vmul.f32 %v392, %v406
        %v410 = vmul.f32 %v393, %v406
        %v411 = vmul.f32 %v394, %v406
        %v412 = vmul.f32 %v395, %v406
        %v413 = vmul.f32 %v396, %v406
        %v414 = vmul.f32 %v397, %v406
        %v415 = vmul.f32 %v398, %v406
        %v416 = vmul.f32 %v399, %v406
        %v417 = vmul.f32 %v400, %v406
        %v418 = vmul.f32 %v401, %v406
        %v419 = vmul.f32 %v402, %v406
        %v420 = vmul.f32 %v403, %v406
        %v421 = vmul.f32 %v404, %v406
        %v422 = vmul.f32 %v405, %v406
        %v423 = vadd.f32 %v359, %v407
        %v424 = vadd.f32 %v361, %v408
        %v425 = vadd.f32 %v363, %v409
        %v426 = vadd.f32 %v365, %v410
        %v427 = vadd.f32 %v367, %v411
        %v428 = vadd.f32 %v369, %v412
        %v429 = vadd.f32 %v371, %v413
        %v430 = vadd.f32 %v373, %v414
        %v431 = vadd.f32 %v375, %v415
        %v432 = vadd.f32 %v377, %v416
        %v433 = vadd.f32 %v379, %v417
        %v434 = vadd.f32 %v381, %v418
        %v435 = vadd.f32 %v383, %v419
        %v436 = vadd.f32 %v385, %v420
        %v437 = vadd.f32 %v387, %v421
        %v438 = vadd.f32 %v389, %v422
        %v439 = vstv %s338
        %v440 = vadd.f32 %v423, %v439
        %v441 = vadd.f32 %v424, %v439
        %v442 = vadd.f32 %v425, %v439
        %v443 = vadd.f32 %v426, %v439
        %v444 = vadd.f32 %v427, %v439
        %v445 = vadd.f32 %v428, %v439
        %v446 = vadd.f32 %v429, %v439
        %v447 = vadd.f32 %v430, %v439
        %v448 = vadd.f32 %v431, %v439
        %v449 = vadd.f32 %v432, %v439
        %v450 = vadd.f32 %v433, %v439
        %v451 = vadd.f32 %v434, %v439
        %v452 = vadd.f32 %v435, %v439
        %v453 = vadd.f32 %v436, %v439
        %v454 = vadd.f32 %v437, %v439
        %v455 = vadd.f32 %v438, %v439
        %v456 = vld [vmem:[%s307] sm:$0xff]
        %v457 = vld [vmem:[%s307 + $0x8] sm:$0xff]
        %v458 = vld [vmem:[%s307 + $0x10] sm:$0xff]
        %v459 = vld [vmem:[%s307 + $0x18] sm:$0xff]
        %v460 = vld [vmem:[%s307 + $0x20] sm:$0xff]
        %v461 = vld [vmem:[%s307 + $0x28] sm:$0xff]
        %v462 = vld [vmem:[%s307 + $0x30] sm:$0xff]
        %v463 = vld [vmem:[%s307 + $0x38] sm:$0xff]
        %v464 = vld [vmem:[%s307 + $0x40] sm:$0xff]
        %v465 = vld [vmem:[%s307 + $0x48] sm:$0xff]
        %v466 = vld [vmem:[%s307 + $0x50] sm:$0xff]
        %v467 = vld [vmem:[%s307 + $0x58] sm:$0xff]
        %v468 = vld [vmem:[%s307 + $0x60] sm:$0xff]
        %v469 = vld [vmem:[%s307 + $0x68] sm:$0xff]
        %v470 = vld [vmem:[%s307 + $0x70] sm:$0xff]
        %v471 = vld [vmem:[%s307 + $0x78] sm:$0xff]
        %v472 = vld [vmem:[%s311] sm:$0x1]
        %v473 = vlaneseq
        %v474 = vand.u32 %v473, 127
        %v475 = vlaneseq
        %v476 = vshrl.u32 %v475, 7
        %477 = vset.pattern.permute.xlu0 0
        %478 = vperm.xlu0 %477, %v456
        %v479 = vpop.permute.xlu0 %478
        %480 = vset.pattern.permute.xlu0 0
        %481 = vperm.xlu0 %480, %v457
        %v482 = vpop.permute.xlu0 %481
        %483 = vset.pattern.permute.xlu0 0
        %484 = vperm.xlu0 %483, %v458
        %v485 = vpop.permute.xlu0 %484
        %486 = vset.pattern.permute.xlu0 0
        %487 = vperm.xlu0 %486, %v459
        %v488 = vpop.permute.xlu0 %487
        %489 = vset.pattern.permute.xlu0 0
        %490 = vperm.xlu0 %489, %v460
        %v491 = vpop.permute.xlu0 %490
        %492 = vset.pattern.permute.xlu0 0
        %493 = vperm.xlu0 %492, %v461
        %v494 = vpop.permute.xlu0 %493
        %495 = vset.pattern.permute.xlu0 0
        %496 = vperm.xlu0 %495, %v462
        %v497 = vpop.permute.xlu0 %496
        %498 = vset.pattern.permute.xlu0 0
        %499 = vperm.xlu0 %498, %v463
        %v500 = vpop.permute.xlu0 %499
        %501 = vset.pattern.permute.xlu0 0
        %502 = vperm.xlu0 %501, %v464
        %v503 = vpop.permute.xlu0 %502
        %504 = vset.pattern.permute.xlu0 0
        %505 = vperm.xlu0 %504, %v465
        %v506 = vpop.permute.xlu0 %505
        %507 = vset.pattern.permute.xlu0 0
        %508 = vperm.xlu0 %507, %v466
        %v509 = vpop.permute.xlu0 %508
        %510 = vset.pattern.permute.xlu0 0
        %511 = vperm.xlu0 %510, %v467
        %v512 = vpop.permute.xlu0 %511
        %513 = vset.pattern.permute.xlu0 0
        %514 = vperm.xlu0 %513, %v468
        %v515 = vpop.permute.xlu0 %514
        %516 = vset.pattern.permute.xlu0 0
        %517 = vperm.xlu0 %516, %v469
        %v518 = vpop.permute.xlu0 %517
        %519 = vset.pattern.permute.xlu0 0
        %520 = vperm.xlu0 %519, %v470
        %v521 = vpop.permute.xlu0 %520
        %522 = vset.pattern.permute.xlu0 0
        %523 = vperm.xlu0 %522, %v471
        %v524 = vpop.permute.xlu0 %523
        %vm525 = vcmp.eq.s32.totalorder %v479, %v474
        %vm526 = vcmp.eq.s32.totalorder %v482, %v474
        %vm527 = vcmp.eq.s32.totalorder %v485, %v474
        %vm528 = vcmp.eq.s32.totalorder %v488, %v474
        %vm529 = vcmp.eq.s32.totalorder %v491, %v474
        %vm530 = vcmp.eq.s32.totalorder %v494, %v474
        %vm531 = vcmp.eq.s32.totalorder %v497, %v474
        %vm532 = vcmp.eq.s32.totalorder %v500, %v474
        %vm533 = vcmp.eq.s32.totalorder %v503, %v474
        %vm534 = vcmp.eq.s32.totalorder %v506, %v474
        %vm535 = vcmp.eq.s32.totalorder %v509, %v474
        %vm536 = vcmp.eq.s32.totalorder %v512, %v474
        %vm537 = vcmp.eq.s32.totalorder %v515, %v474
        %vm538 = vcmp.eq.s32.totalorder %v518, %v474
        %vm539 = vcmp.eq.s32.totalorder %v521, %v474
        %vm540 = vcmp.eq.s32.totalorder %v524, %v474
        %v541 = vsel %vm525, 1, 0
        %v542 = vsel %vm526, 1, 0
        %v543 = vsel %vm527, 1, 0
        %v544 = vsel %vm528, 1, 0
        %v545 = vsel %vm529, 1, 0
        %v546 = vsel %vm530, 1, 0
        %v547 = vsel %vm531, 1, 0
        %v548 = vsel %vm532, 1, 0
        %v549 = vsel %vm533, 1, 0
        %v550 = vsel %vm534, 1, 0
        %v551 = vsel %vm535, 1, 0
        %v552 = vsel %vm536, 1, 0
        %v553 = vsel %vm537, 1, 0
        %v554 = vsel %vm538, 1, 0
        %v555 = vsel %vm539, 1, 0
        %v556 = vsel %vm540, 1, 0
        %v557 = vcvt.s32.f32 %v541
        %v558 = vcvt.s32.f32 %v542
        %v559 = vcvt.s32.f32 %v543
        %v560 = vcvt.s32.f32 %v544
        %v561 = vcvt.s32.f32 %v545
        %v562 = vcvt.s32.f32 %v546
        %v563 = vcvt.s32.f32 %v547
        %v564 = vcvt.s32.f32 %v548
        %v565 = vcvt.s32.f32 %v549
        %v566 = vcvt.s32.f32 %v550
        %v567 = vcvt.s32.f32 %v551
        %v568 = vcvt.s32.f32 %v552
        %v569 = vcvt.s32.f32 %v553
        %v570 = vcvt.s32.f32 %v554
        %v571 = vcvt.s32.f32 %v555
        %v572 = vcvt.s32.f32 %v556
        %v573 = vperm.slane %v472, 0
        %vm574 = vcmp.eq.s32.totalorder %v476, %v573
        %v575 = vsel %vm574, 1, 0
        %v576 = vcvt.s32.f32 %v575
        %578 = vset.pattern.permute.xlu0 0
        %579 = vperm.xlu0 %578, %v440
        %v580 = vpop.permute.xlu0 %579
        %583 = vset.pattern.permute.xlu0 0
        %584 = vperm.xlu0 %583, %v441
        %v585 = vpop.permute.xlu0 %584
        %588 = vset.pattern.permute.xlu0 0
        %589 = vperm.xlu0 %588, %v442
        %v590 = vpop.permute.xlu0 %589
        %593 = vset.pattern.permute.xlu0 0
        %594 = vperm.xlu0 %593, %v443
        %v595 = vpop.permute.xlu0 %594
        %598 = vset.pattern.permute.xlu0 0
        %599 = vperm.xlu0 %598, %v444
        %v600 = vpop.permute.xlu0 %599
        %603 = vset.pattern.permute.xlu0 0
        %604 = vperm.xlu0 %603, %v445
        %v605 = vpop.permute.xlu0 %604
        %608 = vset.pattern.permute.xlu0 0
        %609 = vperm.xlu0 %608, %v446
        %v610 = vpop.permute.xlu0 %609
        %613 = vset.pattern.permute.xlu0 0
        %614 = vperm.xlu0 %613, %v447
        %v615 = vpop.permute.xlu0 %614
        %618 = vset.pattern.permute.xlu0 0
        %619 = vperm.xlu0 %618, %v448
        %v620 = vpop.permute.xlu0 %619
        %623 = vset.pattern.permute.xlu0 0
        %624 = vperm.xlu0 %623, %v449
        %v625 = vpop.permute.xlu0 %624
        %628 = vset.pattern.permute.xlu0 0
        %629 = vperm.xlu0 %628, %v450
        %v630 = vpop.permute.xlu0 %629
        %633 = vset.pattern.permute.xlu0 0
        %634 = vperm.xlu0 %633, %v451
        %v635 = vpop.permute.xlu0 %634
        %638 = vset.pattern.permute.xlu0 0
        %639 = vperm.xlu0 %638, %v452
        %v640 = vpop.permute.xlu0 %639
        %643 = vset.pattern.permute.xlu0 0
        %644 = vperm.xlu0 %643, %v453
        %v645 = vpop.permute.xlu0 %644
        %648 = vset.pattern.permute.xlu0 0
        %649 = vperm.xlu0 %648, %v454
        %v650 = vpop.permute.xlu0 %649
        %653 = vset.pattern.permute.xlu0 0
        %654 = vperm.xlu0 %653, %v455
        %v655 = vpop.permute.xlu0 %654
        %v657 = vsel %vm525, %v580, -inf
        %v658 = vsel %vm526, %v585, -inf
        %v659 = vsel %vm527, %v590, -inf
        %v660 = vsel %vm528, %v595, -inf
        %v661 = vsel %vm529, %v600, -inf
        %v662 = vsel %vm530, %v605, -inf
        %v663 = vsel %vm531, %v610, -inf
        %v664 = vsel %vm532, %v615, -inf
        %v665 = vsel %vm533, %v620, -inf
        %v666 = vsel %vm534, %v625, -inf
        %v667 = vsel %vm535, %v630, -inf
        %v668 = vsel %vm536, %v635, -inf
        %v669 = vsel %vm537, %v640, -inf
        %v670 = vsel %vm538, %v645, -inf
        %v671 = vsel %vm539, %v650, -inf
        %v672 = vsel %vm540, %v655, -inf
        %vm673 = vcmask 64512
        %v674 = vsel %vm673, %v657, -inf
        %v675 = vsel %vm673, %v658, -inf
        %v676 = vsel %vm673, %v659, -inf
        %v677 = vsel %vm673, %v660, -inf
        %v678 = vsel %vm673, %v661, -inf
        %v679 = vmax.f32 %v674, %v678
        %v680 = vsel %vm673, %v662, -inf
        %v681 = vmax.f32 %v675, %v680
        %v682 = vsel %vm673, %v663, -inf
        %v683 = vmax.f32 %v676, %v682
        %v684 = vsel %vm673, %v664, -inf
        %v685 = vmax.f32 %v677, %v684
        %v686 = vsel %vm673, %v665, -inf
        %v687 = vmax.f32 %v679, %v686
        %v688 = vsel %vm673, %v666, -inf
        %v689 = vmax.f32 %v681, %v688
        %v690 = vsel %vm673, %v667, -inf
        %v691 = vmax.f32 %v683, %v690
        %v692 = vsel %vm673, %v668, -inf
        %v693 = vmax.f32 %v685, %v692
        %v694 = vsel %vm673, %v669, -inf
        %v695 = vmax.f32 %v687, %v694
        %v696 = vsel %vm673, %v670, -inf
        %v697 = vmax.f32 %v689, %v696
        %v698 = vsel %vm673, %v671, -inf
        %v699 = vmax.f32 %v691, %v698
        %v700 = vsel %vm673, %v672, -inf
        %v701 = vmax.f32 %v693, %v700
        %v702 = vmax.f32 %v695, %v697
        %v703 = vmax.f32 %v699, %v701
        %v704 = vmax.f32 %v702, %v703
        %v705 = vrot.slane %v704, 4
        %v706 = vmax.f32 %v704, %v705
        %v707 = vrot.slane %v706, 2
        %v708 = vmax.f32 %v706, %v707
        %v709 = vrot.slane %v708, 1
        %v710 = vmax.f32 %v708, %v709
        %v711 = vld [vmem:[#allocation2] sm:$0x1]
        %v712 = vmax.f32 %v711, %v710
        %vm713 = vweird.f32 %v712
        %vm714 = vmxor %vm713, 1
        %v715 = vsel %vm714, %v712, 0.0
        %v716 = vsub.f32 %v711, %v715
        %v717 = vmul.f32 %v716, 1.442695
        %v718 = vpow.pop %v717
        %v720 = vperm.slane %v715, 0
        %v722 = vmul.f32 %v557, %v720
        %v723 = vmul.f32 %v558, %v720
        %v724 = vmul.f32 %v559, %v720
        %v725 = vmul.f32 %v560, %v720
        %v726 = vmul.f32 %v561, %v720
        %v727 = vmul.f32 %v562, %v720
        %v728 = vmul.f32 %v563, %v720
        %v729 = vmul.f32 %v564, %v720
        %v730 = vmul.f32 %v565, %v720
        %v731 = vmul.f32 %v566, %v720
        %v732 = vmul.f32 %v567, %v720
        %v733 = vmul.f32 %v568, %v720
        %v734 = vmul.f32 %v569, %v720
        %v735 = vmul.f32 %v570, %v720
        %v736 = vmul.f32 %v571, %v720
        %v737 = vmul.f32 %v572, %v720
        %v738 = vsel %vm673, %v722, 0.0
        %739 = vadd.xlane.f32.xlu0 %v738
        %v740 = vpop.xlane.xlu0 %739
        %v741 = vsel %vm673, %v723, 0.0
        %742 = vadd.xlane.f32.xlu0 %v741
        %v743 = vpop.xlane.xlu0 %742
        %v744 = vsel %vm673, %v724, 0.0
        %745 = vadd.xlane.f32.xlu0 %v744
        %v746 = vpop.xlane.xlu0 %745
        %v747 = vsel %vm673, %v725, 0.0
        %748 = vadd.xlane.f32.xlu0 %v747
        %v749 = vpop.xlane.xlu0 %748
        %v750 = vsel %vm673, %v726, 0.0
        %751 = vadd.xlane.f32.xlu0 %v750
        %v752 = vpop.xlane.xlu0 %751
        %v753 = vsel %vm673, %v727, 0.0
        %754 = vadd.xlane.f32.xlu0 %v753
        %v755 = vpop.xlane.xlu0 %754
        %v756 = vsel %vm673, %v728, 0.0
        %757 = vadd.xlane.f32.xlu0 %v756
        %v758 = vpop.xlane.xlu0 %757
        %v759 = vsel %vm673, %v729, 0.0
        %760 = vadd.xlane.f32.xlu0 %v759
        %v761 = vpop.xlane.xlu0 %760
        %v762 = vsel %vm673, %v730, 0.0
        %763 = vadd.xlane.f32.xlu0 %v762
        %v764 = vpop.xlane.xlu0 %763
        %v765 = vsel %vm673, %v731, 0.0
        %766 = vadd.xlane.f32.xlu0 %v765
        %v767 = vpop.xlane.xlu0 %766
        %v768 = vsel %vm673, %v732, 0.0
        %769 = vadd.xlane.f32.xlu0 %v768
        %v770 = vpop.xlane.xlu0 %769
        %v771 = vsel %vm673, %v733, 0.0
        %772 = vadd.xlane.f32.xlu0 %v771
        %v773 = vpop.xlane.xlu0 %772
        %v774 = vsel %vm673, %v734, 0.0
        %775 = vadd.xlane.f32.xlu0 %v774
        %v776 = vpop.xlane.xlu0 %775
        %v777 = vsel %vm673, %v735, 0.0
        %778 = vadd.xlane.f32.xlu0 %v777
        %v779 = vpop.xlane.xlu0 %778
        %v780 = vsel %vm673, %v736, 0.0
        %781 = vadd.xlane.f32.xlu0 %v780
        %v782 = vpop.xlane.xlu0 %781
        %v783 = vsel %vm673, %v737, 0.0
        %784 = vadd.xlane.f32.xlu0 %v783
        %v785 = vpop.xlane.xlu0 %784
        %v786 = vsub.f32 %v440, %v740
        %v787 = vsub.f32 %v441, %v743
        %v788 = vsub.f32 %v442, %v746
        %v789 = vsub.f32 %v443, %v749
        %v790 = vsub.f32 %v444, %v752
        %v791 = vsub.f32 %v445, %v755
        %v792 = vsub.f32 %v446, %v758
        %v793 = vsub.f32 %v447, %v761
        %v794 = vsub.f32 %v448, %v764
        %v795 = vsub.f32 %v449, %v767
        %v796 = vsub.f32 %v450, %v770
        %v797 = vsub.f32 %v451, %v773
        %v798 = vsub.f32 %v452, %v776
        %v799 = vsub.f32 %v453, %v779
        %v800 = vsub.f32 %v454, %v782
        %v801 = vsub.f32 %v455, %v785
        %v802 = vmul.f32 %v786, 1.442695
        %v803 = vpow.pop %v802
        %v804 = vmul.f32 %v787, 1.442695
        %v805 = vpow.pop %v804
        %v806 = vmul.f32 %v788, 1.442695
        %v807 = vpow.pop %v806
        %v808 = vmul.f32 %v789, 1.442695
        %v809 = vpow.pop %v808
        %v810 = vmul.f32 %v790, 1.442695
        %v811 = vpow.pop %v810
        %v812 = vmul.f32 %v791, 1.442695
        %v813 = vpow.pop %v812
        %v814 = vmul.f32 %v792, 1.442695
        %v815 = vpow.pop %v814
        %v816 = vmul.f32 %v793, 1.442695
        %v817 = vpow.pop %v816
        %v818 = vmul.f32 %v794, 1.442695
        %v819 = vpow.pop %v818
        %v820 = vmul.f32 %v795, 1.442695
        %v821 = vpow.pop %v820
        %v822 = vmul.f32 %v796, 1.442695
        %v823 = vpow.pop %v822
        %v824 = vmul.f32 %v797, 1.442695
        %v825 = vpow.pop %v824
        %v826 = vmul.f32 %v798, 1.442695
        %v827 = vpow.pop %v826
        %v828 = vmul.f32 %v799, 1.442695
        %v829 = vpow.pop %v828
        %v830 = vmul.f32 %v800, 1.442695
        %v831 = vpow.pop %v830
        %v832 = vmul.f32 %v801, 1.442695
        %v833 = vpow.pop %v832
        %835 = vset.pattern.permute.xlu0 0
        %836 = vperm.xlu0 %835, %v803
        %v837 = vpop.permute.xlu0 %836
        %840 = vset.pattern.permute.xlu0 0
        %841 = vperm.xlu0 %840, %v805
        %v842 = vpop.permute.xlu0 %841
        %845 = vset.pattern.permute.xlu0 0
        %846 = vperm.xlu0 %845, %v807
        %v847 = vpop.permute.xlu0 %846
        %850 = vset.pattern.permute.xlu0 0
        %851 = vperm.xlu0 %850, %v809
        %v852 = vpop.permute.xlu0 %851
        %855 = vset.pattern.permute.xlu0 0
        %856 = vperm.xlu0 %855, %v811
        %v857 = vpop.permute.xlu0 %856
        %860 = vset.pattern.permute.xlu0 0
        %861 = vperm.xlu0 %860, %v813
        %v862 = vpop.permute.xlu0 %861
        %865 = vset.pattern.permute.xlu0 0
        %866 = vperm.xlu0 %865, %v815
        %v867 = vpop.permute.xlu0 %866
        %870 = vset.pattern.permute.xlu0 0
        %871 = vperm.xlu0 %870, %v817
        %v872 = vpop.permute.xlu0 %871
        %875 = vset.pattern.permute.xlu0 0
        %876 = vperm.xlu0 %875, %v819
        %v877 = vpop.permute.xlu0 %876
        %880 = vset.pattern.permute.xlu0 0
        %881 = vperm.xlu0 %880, %v821
        %v882 = vpop.permute.xlu0 %881
        %885 = vset.pattern.permute.xlu0 0
        %886 = vperm.xlu0 %885, %v823
        %v887 = vpop.permute.xlu0 %886
        %890 = vset.pattern.permute.xlu0 0
        %891 = vperm.xlu0 %890, %v825
        %v892 = vpop.permute.xlu0 %891
        %895 = vset.pattern.permute.xlu0 0
        %896 = vperm.xlu0 %895, %v827
        %v897 = vpop.permute.xlu0 %896
        %900 = vset.pattern.permute.xlu0 0
        %901 = vperm.xlu0 %900, %v829
        %v902 = vpop.permute.xlu0 %901
        %905 = vset.pattern.permute.xlu0 0
        %906 = vperm.xlu0 %905, %v831
        %v907 = vpop.permute.xlu0 %906
        %910 = vset.pattern.permute.xlu0 0
        %911 = vperm.xlu0 %910, %v833
        %v912 = vpop.permute.xlu0 %911
        %v914 = vmul.f32 %v557, %v837
        %v915 = vmul.f32 %v558, %v842
        %v916 = vmul.f32 %v559, %v847
        %v917 = vmul.f32 %v560, %v852
        %v918 = vmul.f32 %v561, %v857
        %v919 = vmul.f32 %v562, %v862
        %v920 = vmul.f32 %v563, %v867
        %v921 = vmul.f32 %v564, %v872
        %v922 = vmul.f32 %v565, %v877
        %v923 = vmul.f32 %v566, %v882
        %v924 = vmul.f32 %v567, %v887
        %v925 = vmul.f32 %v568, %v892
        %v926 = vmul.f32 %v569, %v897
        %v927 = vmul.f32 %v570, %v902
        %v928 = vmul.f32 %v571, %v907
        %v929 = vmul.f32 %v572, %v912
        %v930 = vsel %vm673, %v914, 0.0
        %v931 = vsel %vm673, %v915, 0.0
        %v932 = vadd.f32 %v930, %v931
        %v933 = vsel %vm673, %v916, 0.0
        %v934 = vadd.f32 %v932, %v933
        %v935 = vsel %vm673, %v917, 0.0
        %v936 = vadd.f32 %v934, %v935
        %v937 = vsel %vm673, %v918, 0.0
        %v938 = vadd.f32 %v936, %v937
        %v939 = vsel %vm673, %v919, 0.0
        %v940 = vadd.f32 %v938, %v939
        %v941 = vsel %vm673, %v920, 0.0
        %v942 = vadd.f32 %v940, %v941
        %v943 = vsel %vm673, %v921, 0.0
        %v944 = vadd.f32 %v942, %v943
        %v945 = vsel %vm673, %v922, 0.0
        %v946 = vadd.f32 %v944, %v945
        %v947 = vsel %vm673, %v923, 0.0
        %v948 = vadd.f32 %v946, %v947
        %v949 = vsel %vm673, %v924, 0.0
        %v950 = vadd.f32 %v948, %v949
        %v951 = vsel %vm673, %v925, 0.0
        %v952 = vadd.f32 %v950, %v951
        %v953 = vsel %vm673, %v926, 0.0
        %v954 = vadd.f32 %v952, %v953
        %v955 = vsel %vm673, %v927, 0.0
        %v956 = vadd.f32 %v954, %v955
        %v957 = vsel %vm673, %v928, 0.0
        %v958 = vadd.f32 %v956, %v957
        %v959 = vsel %vm673, %v929, 0.0
        %v960 = vadd.f32 %v958, %v959
        %v961 = vrot.slane %v960, 4
        %v962 = vadd.f32 %v960, %v961
        %v963 = vrot.slane %v962, 2
        %v964 = vadd.f32 %v962, %v963
        %v965 = vrot.slane %v964, 1
        %v966 = vadd.f32 %v964, %v965
        %v967 = vld [vmem:[#allocation3] sm:$0x1]
        %v968 = vmul.f32 %v718, %v967
        %v969 = vadd.f32 %v968, %v966
        %vm970 = vcmask 57344
        %971 = vst.msk [vmem:[#allocation3] sm:$0x1] %vm970, %v969
        %972 = vst.msk [vmem:[#allocation2] sm:$0x1] %vm970, %v712
        %v973 = vmul.f32 %v837, %v320
        %v974 = vmul.f32 %v842, %v321
        %v975 = vmul.f32 %v847, %v322
        %v976 = vmul.f32 %v852, %v323
        %v977 = vmul.f32 %v857, %v324
        %v978 = vmul.f32 %v862, %v325
        %v979 = vmul.f32 %v867, %v326
        %v980 = vmul.f32 %v872, %v327
        %v981 = vmul.f32 %v877, %v328
        %v982 = vmul.f32 %v882, %v329
        %v983 = vmul.f32 %v887, %v330
        %v984 = vmul.f32 %v892, %v331
        %v985 = vmul.f32 %v897, %v332
        %v986 = vmul.f32 %v902, %v333
        %v987 = vmul.f32 %v907, %v334
        %v988 = vmul.f32 %v912, %v335
        %989 = vmatpush.msra.mxu0 %v988
        %990 = vmatpush.msra.mxu0 %v987
        %991 = vmatpush.msra.mxu0 %v986
        %992 = vmatpush.msra.mxu0 %v985
        %993 = vmatpush.msra.mxu0 %v984
        %994 = vmatpush.msra.mxu0 %v983
        %995 = vmatpush.msra.mxu0 %v982
        %996 = vmatpush.msra.mxu0 %v981
        %997 = vmatpush.msra.mxu0 %v980
        %998 = vmatpush.msra.mxu0 %v979
        %999 = vmatpush.msra.mxu0 %v978
        %1000 = vmatpush.msra.mxu0 %v977
        %1001 = vmatpush.msra.mxu0 %v976
        %1002 = vmatpush.msra.mxu0 %v975
        %1003 = vmatpush.msra.mxu0 %v974
        %1004 = vmatpush.msra.mxu0 %v973
        %1005 = vmatmul.f32.gmra.mxu0 %v576
        %v1006 = vpop.f32.mrf.mxu0
        %v1007 = vadd.f32 0.0, %v1006
        %1008 = vdwg.mxu0
        %v1009 = vld [vmem:[#allocation4] sm:$0xff]
        %vm1010 = vcmp.eq.s32.totalorder %v476, %v474
        %v1012 = vperm.slane %v718, 0
        %v1014 = vsel %vm1010, %v1012, 0.0
        %v1016 = vsel %vm673, %v1014, 0
        %1018 = vmatpush.msra.mxu0 0.0
        %1019 = vmatpush.msra.mxu0 0.0
        %1020 = vmatpush.msra.mxu0 0.0
        %1021 = vmatpush.msra.mxu0 0.0
        %1022 = vmatpush.msra.mxu0 0.0
        %1023 = vmatpush.msra.mxu0 0.0
        %1024 = vmatpush.msra.mxu0 0.0
        %1025 = vmatpush.msra.mxu0 0.0
        %1026 = vmatpush.msra.mxu0 0.0
        %1027 = vmatpush.msra.mxu0 0.0
        %1028 = vmatpush.msra.mxu0 0.0
        %1029 = vmatpush.msra.mxu0 0.0
        %1030 = vmatpush.msra.mxu0 0.0
        %1031 = vmatpush.msra.mxu0 0.0
        %1032 = vmatpush.msra.mxu0 0.0
        %1033 = vmatpush.msra.mxu0 %v1009
        %1034 = vmatmul.f32.gmra.mxu0 %v1016
        %v1035 = vpop.f32.mrf.mxu0
        %v1036 = vadd.f32 %v1007, %v1035
        %1037 = vdwg.mxu0
        %1038 = vst [vmem:[#allocation4] sm:$0xff] %v1036
        %p1039 = scmp.eq.s32.totalorder %s19, 2
        // Predicated region
        $region53: #{tpu_custom_call.1} parent=43 // pred_check
          %p1040 = pneg %p1039
        $region54: #{tpu_custom_call.1} parent=43 // pred_check_branch
          %1042 = sbr.rel (%p1040) target = $region56
        $region55: #{tpu_custom_call.1} parent=43 // pred_region
          %v1043 = vld [vmem:[#allocation3] sm:$0x1]
          %vm1044 = vcmp.gt.f32.partialorder %v1043, 0.0
          %v1045 = vsel %vm1044, %v1043, 1.0
          %v1046 = vrcp.pop %v1045
          %v1047 = vmul.f32 %v1045, %v1046
          %v1048 = vsub.f32 1.0, %v1047
          %v1049 = vmul.f32 %v1046, %v1048
          %v1050 = vadd.f32 %v1046, %v1049
          %vm1051 = vweird.f32 %v1045
          %vm1052 = vweird.f32 %v1046
          %vm1053 = vmor %vm1051, %vm1052
          %v1054 = vsel %vm1053, %v1046, %v1050
          %v1055 = vand.u32 2147483647, %v1045
          %vm1056 = vcmp.eq.f32.partialorder %v1055, 8.507059e+37
          %v1057 = vand.u32 %v1045, 2147483648
          %v1058 = vor.u32 1.1754944e-38, %v1057
          %v1059 = vsel %vm1056, %v1058, %v1054
          %v1060 = vmul.f32 1.0, %v1059
          %v1061 = vld [vmem:[#allocation4] sm:$0xff]
          %v1063 = vperm.slane %v1060, 0
          %v1065 = vsel %vm1010, %v1063, 0.0
          %v1067 = vsel %vm673, %v1065, 0
          %1069 = vmatpush.msra.mxu0 0.0
          %1070 = vmatpush.msra.mxu0 0.0
          %1071 = vmatpush.msra.mxu0 0.0
          %1072 = vmatpush.msra.mxu0 0.0
          %1073 = vmatpush.msra.mxu0 0.0
          %1074 = vmatpush.msra.mxu0 0.0
          %1075 = vmatpush.msra.mxu0 0.0
          %1076 = vmatpush.msra.mxu0 0.0
          %1077 = vmatpush.msra.mxu0 0.0
          %1078 = vmatpush.msra.mxu0 0.0
          %1079 = vmatpush.msra.mxu0 0.0
          %1080 = vmatpush.msra.mxu0 0.0
          %1081 = vmatpush.msra.mxu0 0.0
          %1082 = vmatpush.msra.mxu0 0.0
          %1083 = vmatpush.msra.mxu0 0.0
          %1084 = vmatpush.msra.mxu0 %v1061
          %1085 = vmatmul.f32.gmra.mxu0 %v1067
          %v1086 = vpop.f32.mrf.mxu0
          %v1087 = vadd.f32 0.0, %v1086
          %1088 = vdwg.mxu0
          %1089 = vst [vmem:[#allocation8] sm:$0xff] %v1087
        $region56: #{tpu_custom_call.1} parent=43 // pred_fallthru
          _
        // Predicated region
        $region57: #{tpu_custom_call.1} parent=43 // pred_check
          %p1090 = pneg %p178
        $region58: #{tpu_custom_call.1} parent=43 // pred_check_branch
          %1092 = sbr.rel (%p1090) target = $region60
        $region59: #{tpu_custom_call.1} parent=43 // pred_region
          %1094 = vsyncadd [#allocation6], 0
          %s1096 = sshll.u32 [#allocation8], 4
          %s1097 = int_to_ptr.vmem [resolvable:$true] %s1096
          %s1098 = sshll.u32 %s6, 4
          %s1099 = int_to_ptr.hbm [resolvable:$true] %s1098
          %1101 = dma.vmem_to_hbm [thread:$0]  %s1097, 128, %s1099, [#allocation6]
        $region60: #{tpu_custom_call.1} parent=43 // pred_fallthru
          _
        // Predicated region
        $region61: #{tpu_custom_call.1} parent=43 // pred_check
          %p1102 = pneg %p178
        $region62: #{tpu_custom_call.1} parent=43 // pred_check_branch
          %1104 = sbr.rel (%p1102) target = $region64
        $region63: #{tpu_custom_call.1} parent=43 // pred_region
          %1106 = dma.done [#allocation6], 128
        $region64: #{tpu_custom_call.1} parent=43 // pred_fallthru
          _
      $region44: #{tpu_custom_call.1} parent=5 // pred_fallthru
        _
      %p1107 = scmp.le.s32.totalorder 2, %s14
      // Predicated region
      $region65: #{tpu_custom_call.1} parent=5 // pred_check
        %p1108 = pneg %p1107
      $region66: #{tpu_custom_call.1} parent=5 // pred_check_branch
        %1110 = sbr.rel (%p1108) target = $region68
      $region67: #{tpu_custom_call.1} parent=5 // pred_region
        %s1111 = ssub.s32 %s14, 2
      $region68: #{tpu_custom_call.1} parent=5 // pred_fallthru
        _
    $region6: #{tpu_custom_call.1} parent=1 // loop_footer
      %s18 = sadd.s32 1, %s14
    $region7: #{tpu_custom_call.1} parent=1 // loop_footer_branch
      %13 = sbr.rel target = $region3
    $region8: #{tpu_custom_call.1} parent=1 // loop_exit
      _
    %1112 = vsyncpa [#allocation6], 1
    %s1113 = scalar_lea.sflag [#allocation6], 1
    %1114 = vsyncpa %s1113, 1
    %1115 = vsyncpa [#allocation7], 1
    %s1116 = scalar_lea.sflag [#allocation7], 1
    %1117 = vsyncpa %s1116, 1

</llo_original>
